<compile_context>
chip_gen: v5e
topology: v5e:2x2
jax: 0.10.0
libtpu: 0.0.40
codegen_flags: <defaults>
</compile_context>

<pallas_src>
import jax
import jax.numpy as jnp
from jax.experimental import pallas as pl
from jax.experimental.pallas import tpu as pltpu

EPS = 1e-5

# Row layout of the packed vector-parameter slab (shape (16, 20), f32).
_VROW_G0A, _VROW_G0B = 0, 1
_VROW_BE0A, _VROW_BE0B = 2, 3
_VROW_B1, _VROW_G1, _VROW_BE1 = 4, 5, 6
_VROW_B2, _VROW_G2, _VROW_BE2 = 7, 8, 9
_VROW_B3, _VROW_G3, _VROW_BE3 = 10, 11, 12
_VROW_B4 = 13

# Row offsets of the packed weight slab (shape (88, 20), f32), 8-row aligned
# so in-kernel sublane slices start on tile boundaries.
_WOFF_W1A = 0    # (10, 20)  rows of W1 multiplying the `a` half
_WOFF_W1B = 16   # (10, 20)  rows of W1 multiplying the `b` half
_WOFF_W2 = 32    # (20, 10)
_WOFF_W3 = 56    # (10, 10)
_WOFF_W4 = 72    # (10, 10)
_W_SLAB_ROWS = 88


def _top_model_kernel(a_ref, b_ref, vec_ref, w_ref, out_ref):
    a = a_ref[...].astype(jnp.float32)   # (B, 10)
    b = b_ref[...].astype(jnp.float32)   # (B, 10)
    inv_n = 1.0 / a.shape[0]             # static batch size

    vec = vec_ref[...]                   # (16, 20)
    w = w_ref[...]                       # (88, 20)

    g0a = vec[_VROW_G0A:_VROW_G0A + 1, 0:10]
    g0b = vec[_VROW_G0B:_VROW_G0B + 1, 0:10]
    be0a = vec[_VROW_BE0A:_VROW_BE0A + 1, 0:10]
    be0b = vec[_VROW_BE0B:_VROW_BE0B + 1, 0:10]
    b1 = vec[_VROW_B1:_VROW_B1 + 1, 0:20]
    g1 = vec[_VROW_G1:_VROW_G1 + 1, 0:20]
    be1 = vec[_VROW_BE1:_VROW_BE1 + 1, 0:20]
    b2 = vec[_VROW_B2:_VROW_B2 + 1, 0:10]
    g2 = vec[_VROW_G2:_VROW_G2 + 1, 0:10]
    be2 = vec[_VROW_BE2:_VROW_BE2 + 1, 0:10]
    b3 = vec[_VROW_B3:_VROW_B3 + 1, 0:10]
    g3 = vec[_VROW_G3:_VROW_G3 + 1, 0:10]
    be3 = vec[_VROW_BE3:_VROW_BE3 + 1, 0:10]
    b4 = vec[_VROW_B4:_VROW_B4 + 1, 0:10]

    w1a = w[_WOFF_W1A:_WOFF_W1A + 10, 0:20]   # (10, 20)
    w1b = w[_WOFF_W1B:_WOFF_W1B + 10, 0:20]   # (10, 20)
    w2 = w[_WOFF_W2:_WOFF_W2 + 20, 0:10]      # (20, 10)
    w3 = w[_WOFF_W3:_WOFF_W3 + 10, 0:10]      # (10, 10)
    w4 = w[_WOFF_W4:_WOFF_W4 + 10, 0:10]      # (10, 10)

    def bn_relu(x, gamma, beta):
        # BatchNorm1d (training mode: batch mean, biased batch variance) + ReLU,
        # fused into one FMA per element. One pass over x for both stats.
        mean = jnp.sum(x, axis=0, keepdims=True) * inv_n
        mean_sq = jnp.sum(x * x, axis=0, keepdims=True) * inv_n
        var = mean_sq - mean * mean
        scale = gamma * jax.lax.rsqrt(var + EPS)
        shift = beta - mean * scale
        return jnp.maximum(x * scale + shift, 0.0)

    def matmul(x, wt):
        return jnp.dot(x, wt, preferred_element_type=jnp.float32)

    # fc1(relu(bn0(concat(a, b)))) without materializing the concat.
    h = matmul(bn_relu(a, g0a, be0a), w1a) + matmul(bn_relu(b, g0b, be0b), w1b) + b1
    h = matmul(bn_relu(h, g1, be1), w2) + b2
    h = matmul(bn_relu(h, g2, be2), w3) + b3
    h = matmul(bn_relu(h, g3, be3), w4) + b4

    out_ref[...] = h.astype(out_ref.dtype)


def pack_params(params):
    """Pack the 16 per-layer parameters into two slabs (done once, outside
    the hot path): a (16, 20) vector slab and an (88, 20) weight slab."""
    vec = jnp.zeros((16, 20), jnp.float32)
    rows = [
        (_VROW_G0A, params["g0"][0, :10]), (_VROW_G0B, params["g0"][0, 10:]),
        (_VROW_BE0A, params["be0"][0, :10]), (_VROW_BE0B, params["be0"][0, 10:]),
        (_VROW_B1, params["b1"][0]), (_VROW_G1, params["g1"][0]),
        (_VROW_BE1, params["be1"][0]),
        (_VROW_B2, params["b2"][0]), (_VROW_G2, params["g2"][0]),
        (_VROW_BE2, params["be2"][0]),
        (_VROW_B3, params["b3"][0]), (_VROW_G3, params["g3"][0]),
        (_VROW_BE3, params["be3"][0]),
        (_VROW_B4, params["b4"][0]),
    ]
    for r, v in rows:
        vec = vec.at[r, : v.shape[0]].set(v)

    w = jnp.zeros((_W_SLAB_ROWS, 20), jnp.float32)
    w = w.at[_WOFF_W1A:_WOFF_W1A + 10, 0:20].set(params["w1"][:10, :])
    w = w.at[_WOFF_W1B:_WOFF_W1B + 10, 0:20].set(params["w1"][10:, :])
    w = w.at[_WOFF_W2:_WOFF_W2 + 20, 0:10].set(params["w2"])
    w = w.at[_WOFF_W3:_WOFF_W3 + 10, 0:10].set(params["w3"])
    w = w.at[_WOFF_W4:_WOFF_W4 + 10, 0:10].set(params["w4"])
    return vec, w


def top_model_forward(a, b, vec_slab, w_slab):
    """a, b: (B, 10) float32 bottom-model outputs; slabs from pack_params."""
    B = a.shape[0]
    vmem_spec = pl.BlockSpec(memory_space=pltpu.MemorySpace.VMEM)
    return pl.pallas_call(
        _top_model_kernel,
        out_shape=jax.ShapeDtypeStruct((B, 10), jnp.float32),
        in_specs=[vmem_spec] * 4,
        out_specs=vmem_spec,
        compiler_params=pltpu.CompilerParams(
            # Explicit, generation-safe scoped-VMEM ceiling (<= default on
            # v6e/v7x, raises the 16 MiB default on v5e headroom-free).
            vmem_limit_bytes=32 * 1024 * 1024,
        ),
    )(a, b, vec_slab, w_slab)


top_model_forward_jit = jax.jit(top_model_forward)


def init_params(key):
    """Deterministic init mirroring weights_init:
       Linear: xavier_normal_ weight, normal_ bias.
       BatchNorm1d: weight ~ N(1, 0.02), bias = 0."""
    keys = jax.random.split(key, 16)
    ki = iter(keys)

    def xavier_normal(k, fan_in, fan_out):
        std = (2.0 / (fan_in + fan_out)) ** 0.5
        # PyTorch Linear weight is (out, in); we store transposed (in, out).
        return (jax.random.normal(k, (fan_out, fan_in), jnp.float32) * std).T

    def normal_bias(k, n):
        return jax.random.normal(k, (1, n), jnp.float32)

    def bn_gamma(k, n):
        return 1.0 + 0.02 * jax.random.normal(k, (1, n), jnp.float32)

    params = {}
    params["w1"] = xavier_normal(next(ki), 20, 20)   # fc1: 20 -> 20
    params["b1"] = normal_bias(next(ki), 20)
    params["w2"] = xavier_normal(next(ki), 20, 10)   # fc2: 20 -> 10
    params["b2"] = normal_bias(next(ki), 10)
    params["w3"] = xavier_normal(next(ki), 10, 10)   # fc3: 10 -> 10
    params["b3"] = normal_bias(next(ki), 10)
    params["w4"] = xavier_normal(next(ki), 10, 10)   # fc4: 10 -> 10
    params["b4"] = normal_bias(next(ki), 10)
    params["g0"] = bn_gamma(next(ki), 20)
    params["be0"] = jnp.zeros((1, 20), jnp.float32)
    params["g1"] = bn_gamma(next(ki), 20)
    params["be1"] = jnp.zeros((1, 20), jnp.float32)
    params["g2"] = bn_gamma(next(ki), 10)
    params["be2"] = jnp.zeros((1, 10), jnp.float32)
    params["g3"] = bn_gamma(next(ki), 10)
    params["be3"] = jnp.zeros((1, 10), jnp.float32)
    return params


def _reference_forward(a, b, params):
    """Pure-JAX reference with the original (concat + two-pass BN) math."""
    x = jnp.concatenate([a, b], axis=1)

    def bn_relu(x, g, be):
        m = jnp.mean(x, axis=0, keepdims=True)
        v = jnp.mean((x - m) ** 2, axis=0, keepdims=True)
        return jnp.maximum((x - m) / jnp.sqrt(v + EPS) * g + be, 0.0)

    h = bn_relu(x, params["g0"], params["be0"]) @ params["w1"] + params["b1"]
    h = bn_relu(h, params["g1"], params["be1"]) @ params["w2"] + params["b2"]
    h = bn_relu(h, params["g2"], params["be2"]) @ params["w3"] + params["b3"]
    h = bn_relu(h, params["g3"], params["be3"]) @ params["w4"] + params["b4"]
    return h


if __name__ == "__main__":
    key = jax.random.PRNGKey(0)
    k_params, k_a, k_b = jax.random.split(key, 3)

    params = init_params(k_params)
    vec_slab, w_slab = pack_params(params)

    B = 8
    a = jax.random.normal(k_a, (B, 10), jnp.float32)
    b = jax.random.normal(k_b, (B, 10), jnp.float32)

    out = top_model_forward_jit(a, b, vec_slab, w_slab)
    out = jax.block_until_ready(out)

    ref = _reference_forward(a, b, params)
    assert out.shape == (B, 10)
    assert jnp.allclose(out, ref, atol=1e-4, rtol=1e-4), "mismatch vs reference"

    print("KERNEL_OK")
</pallas_src>

<mosaic_0001>
module attributes {stable_mosaic.version = 11 : i64} {
  func.func @_top_model_kernel(%arg0: memref<8x10xf32, #tpu.memory_space<vmem>>, %arg1: memref<8x10xf32, #tpu.memory_space<vmem>>, %arg2: memref<16x20xf32, #tpu.memory_space<vmem>>, %arg3: memref<88x20xf32, #tpu.memory_space<vmem>>, %arg4: memref<8x10xf32, #tpu.memory_space<vmem>>) attributes {dimension_semantics = [], scalar_prefetch = 0 : i64, scratch_operands = 0 : i64, tpu.core_type = #tpu.core_type<tc>} {
    %c0 = arith.constant 0 : index
    %c0_0 = arith.constant 0 : index
    %0 = vector.load %arg0[%c0, %c0_0] : memref<8x10xf32, #tpu.memory_space<vmem>>, vector<8x10xf32>
    %c0_1 = arith.constant 0 : index
    %c0_2 = arith.constant 0 : index
    %1 = vector.load %arg1[%c0_1, %c0_2] : memref<8x10xf32, #tpu.memory_space<vmem>>, vector<8x10xf32>
    %c0_3 = arith.constant 0 : index
    %c0_4 = arith.constant 0 : index
    %2 = vector.load %arg2[%c0_3, %c0_4] : memref<16x20xf32, #tpu.memory_space<vmem>>, vector<16x20xf32>
    %c0_5 = arith.constant 0 : index
    %c0_6 = arith.constant 0 : index
    %3 = vector.load %arg3[%c0_5, %c0_6] : memref<88x20xf32, #tpu.memory_space<vmem>>, vector<88x20xf32>
    %4 = vector.extract_strided_slice %2 {offsets = [0, 0], sizes = [1, 10], strides = [1, 1]} : vector<16x20xf32> to vector<1x10xf32>
    %5 = vector.extract_strided_slice %2 {offsets = [1, 0], sizes = [1, 10], strides = [1, 1]} : vector<16x20xf32> to vector<1x10xf32>
    %6 = vector.extract_strided_slice %2 {offsets = [2, 0], sizes = [1, 10], strides = [1, 1]} : vector<16x20xf32> to vector<1x10xf32>
    %7 = vector.extract_strided_slice %2 {offsets = [3, 0], sizes = [1, 10], strides = [1, 1]} : vector<16x20xf32> to vector<1x10xf32>
    %8 = vector.extract_strided_slice %2 {offsets = [4, 0], sizes = [1, 20], strides = [1, 1]} : vector<16x20xf32> to vector<1x20xf32>
    %9 = vector.extract_strided_slice %2 {offsets = [5, 0], sizes = [1, 20], strides = [1, 1]} : vector<16x20xf32> to vector<1x20xf32>
    %10 = vector.extract_strided_slice %2 {offsets = [6, 0], sizes = [1, 20], strides = [1, 1]} : vector<16x20xf32> to vector<1x20xf32>
    %11 = vector.extract_strided_slice %2 {offsets = [7, 0], sizes = [1, 10], strides = [1, 1]} : vector<16x20xf32> to vector<1x10xf32>
    %12 = vector.extract_strided_slice %2 {offsets = [8, 0], sizes = [1, 10], strides = [1, 1]} : vector<16x20xf32> to vector<1x10xf32>
    %13 = vector.extract_strided_slice %2 {offsets = [9, 0], sizes = [1, 10], strides = [1, 1]} : vector<16x20xf32> to vector<1x10xf32>
    %14 = vector.extract_strided_slice %2 {offsets = [10, 0], sizes = [1, 10], strides = [1, 1]} : vector<16x20xf32> to vector<1x10xf32>
    %15 = vector.extract_strided_slice %2 {offsets = [11, 0], sizes = [1, 10], strides = [1, 1]} : vector<16x20xf32> to vector<1x10xf32>
    %16 = vector.extract_strided_slice %2 {offsets = [12, 0], sizes = [1, 10], strides = [1, 1]} : vector<16x20xf32> to vector<1x10xf32>
    %17 = vector.extract_strided_slice %2 {offsets = [13, 0], sizes = [1, 10], strides = [1, 1]} : vector<16x20xf32> to vector<1x10xf32>
    %18 = vector.extract_strided_slice %3 {offsets = [0, 0], sizes = [10, 20], strides = [1, 1]} : vector<88x20xf32> to vector<10x20xf32>
    %19 = vector.extract_strided_slice %3 {offsets = [16, 0], sizes = [10, 20], strides = [1, 1]} : vector<88x20xf32> to vector<10x20xf32>
    %20 = vector.extract_strided_slice %3 {offsets = [32, 0], sizes = [20, 10], strides = [1, 1]} : vector<88x20xf32> to vector<20x10xf32>
    %21 = vector.extract_strided_slice %3 {offsets = [56, 0], sizes = [10, 10], strides = [1, 1]} : vector<88x20xf32> to vector<10x10xf32>
    %22 = vector.extract_strided_slice %3 {offsets = [72, 0], sizes = [10, 10], strides = [1, 1]} : vector<88x20xf32> to vector<10x10xf32>
    %cst = arith.constant dense<0.000000e+00> : vector<10xf32>
    %23 = vector.multi_reduction <add>, %0, %cst [0] : vector<8x10xf32> to vector<10xf32>
    %24 = vector.shape_cast %23 : vector<10xf32> to vector<1x10xf32>
    %cst_7 = arith.constant 1.250000e-01 : f32
    %25 = vector.broadcast %cst_7 : f32 to vector<1x10xf32>
    %26 = arith.mulf %24, %25 : vector<1x10xf32>
    %27 = arith.mulf %0, %0 : vector<8x10xf32>
    %cst_8 = arith.constant dense<0.000000e+00> : vector<10xf32>
    %28 = vector.multi_reduction <add>, %27, %cst_8 [0] : vector<8x10xf32> to vector<10xf32>
    %29 = vector.shape_cast %28 : vector<10xf32> to vector<1x10xf32>
    %cst_9 = arith.constant 1.250000e-01 : f32
    %30 = vector.broadcast %cst_9 : f32 to vector<1x10xf32>
    %31 = arith.mulf %29, %30 : vector<1x10xf32>
    %32 = arith.mulf %26, %26 : vector<1x10xf32>
    %33 = arith.subf %31, %32 : vector<1x10xf32>
    %cst_10 = arith.constant 9.99999974E-6 : f32
    %34 = vector.broadcast %cst_10 : f32 to vector<1x10xf32>
    %35 = arith.addf %33, %34 : vector<1x10xf32>
    %36 = math.rsqrt %35 : vector<1x10xf32>
    %37 = arith.mulf %4, %36 : vector<1x10xf32>
    %38 = arith.mulf %26, %37 : vector<1x10xf32>
    %39 = arith.subf %6, %38 : vector<1x10xf32>
    %40 = vector.broadcast %37 : vector<1x10xf32> to vector<8x10xf32>
    %41 = arith.mulf %0, %40 : vector<8x10xf32>
    %42 = vector.broadcast %39 : vector<1x10xf32> to vector<8x10xf32>
    %43 = arith.addf %41, %42 : vector<8x10xf32>
    %cst_11 = arith.constant 0.000000e+00 : f32
    %44 = vector.broadcast %cst_11 : f32 to vector<8x10xf32>
    %45 = arith.maximumf %43, %44 : vector<8x10xf32>
    %cst_12 = arith.constant dense<0.000000e+00> : vector<8x20xf32>
    %46 = tpu.matmul %45, %18, %cst_12 {dimension_numbers = #tpu.dot_dimension_numbers<[1], [0], [0], [1], [0, 0, 1, 1], [], []>} : vector<8x10xf32>, vector<10x20xf32>, vector<8x20xf32> -> vector<8x20xf32>
    %cst_13 = arith.constant dense<0.000000e+00> : vector<10xf32>
    %47 = vector.multi_reduction <add>, %1, %cst_13 [0] : vector<8x10xf32> to vector<10xf32>
    %48 = vector.shape_cast %47 : vector<10xf32> to vector<1x10xf32>
    %cst_14 = arith.constant 1.250000e-01 : f32
    %49 = vector.broadcast %cst_14 : f32 to vector<1x10xf32>
    %50 = arith.mulf %48, %49 : vector<1x10xf32>
    %51 = arith.mulf %1, %1 : vector<8x10xf32>
    %cst_15 = arith.constant dense<0.000000e+00> : vector<10xf32>
    %52 = vector.multi_reduction <add>, %51, %cst_15 [0] : vector<8x10xf32> to vector<10xf32>
    %53 = vector.shape_cast %52 : vector<10xf32> to vector<1x10xf32>
    %cst_16 = arith.constant 1.250000e-01 : f32
    %54 = vector.broadcast %cst_16 : f32 to vector<1x10xf32>
    %55 = arith.mulf %53, %54 : vector<1x10xf32>
    %56 = arith.mulf %50, %50 : vector<1x10xf32>
    %57 = arith.subf %55, %56 : vector<1x10xf32>
    %cst_17 = arith.constant 9.99999974E-6 : f32
    %58 = vector.broadcast %cst_17 : f32 to vector<1x10xf32>
    %59 = arith.addf %57, %58 : vector<1x10xf32>
    %60 = math.rsqrt %59 : vector<1x10xf32>
    %61 = arith.mulf %5, %60 : vector<1x10xf32>
    %62 = arith.mulf %50, %61 : vector<1x10xf32>
    %63 = arith.subf %7, %62 : vector<1x10xf32>
    %64 = vector.broadcast %61 : vector<1x10xf32> to vector<8x10xf32>
    %65 = arith.mulf %1, %64 : vector<8x10xf32>
    %66 = vector.broadcast %63 : vector<1x10xf32> to vector<8x10xf32>
    %67 = arith.addf %65, %66 : vector<8x10xf32>
    %cst_18 = arith.constant 0.000000e+00 : f32
    %68 = vector.broadcast %cst_18 : f32 to vector<8x10xf32>
    %69 = arith.maximumf %67, %68 : vector<8x10xf32>
    %cst_19 = arith.constant dense<0.000000e+00> : vector<8x20xf32>
    %70 = tpu.matmul %69, %19, %cst_19 {dimension_numbers = #tpu.dot_dimension_numbers<[1], [0], [0], [1], [0, 0, 1, 1], [], []>} : vector<8x10xf32>, vector<10x20xf32>, vector<8x20xf32> -> vector<8x20xf32>
    %71 = arith.addf %46, %70 : vector<8x20xf32>
    %72 = vector.broadcast %8 : vector<1x20xf32> to vector<8x20xf32>
    %73 = arith.addf %71, %72 : vector<8x20xf32>
    %cst_20 = arith.constant dense<0.000000e+00> : vector<20xf32>
    %74 = vector.multi_reduction <add>, %73, %cst_20 [0] : vector<8x20xf32> to vector<20xf32>
    %75 = vector.shape_cast %74 : vector<20xf32> to vector<1x20xf32>
    %cst_21 = arith.constant 1.250000e-01 : f32
    %76 = vector.broadcast %cst_21 : f32 to vector<1x20xf32>
    %77 = arith.mulf %75, %76 : vector<1x20xf32>
    %78 = arith.mulf %73, %73 : vector<8x20xf32>
    %cst_22 = arith.constant dense<0.000000e+00> : vector<20xf32>
    %79 = vector.multi_reduction <add>, %78, %cst_22 [0] : vector<8x20xf32> to vector<20xf32>
    %80 = vector.shape_cast %79 : vector<20xf32> to vector<1x20xf32>
    %cst_23 = arith.constant 1.250000e-01 : f32
    %81 = vector.broadcast %cst_23 : f32 to vector<1x20xf32>
    %82 = arith.mulf %80, %81 : vector<1x20xf32>
    %83 = arith.mulf %77, %77 : vector<1x20xf32>
    %84 = arith.subf %82, %83 : vector<1x20xf32>
    %cst_24 = arith.constant 9.99999974E-6 : f32
    %85 = vector.broadcast %cst_24 : f32 to vector<1x20xf32>
    %86 = arith.addf %84, %85 : vector<1x20xf32>
    %87 = math.rsqrt %86 : vector<1x20xf32>
    %88 = arith.mulf %9, %87 : vector<1x20xf32>
    %89 = arith.mulf %77, %88 : vector<1x20xf32>
    %90 = arith.subf %10, %89 : vector<1x20xf32>
    %91 = vector.broadcast %88 : vector<1x20xf32> to vector<8x20xf32>
    %92 = arith.mulf %73, %91 : vector<8x20xf32>
    %93 = vector.broadcast %90 : vector<1x20xf32> to vector<8x20xf32>
    %94 = arith.addf %92, %93 : vector<8x20xf32>
    %cst_25 = arith.constant 0.000000e+00 : f32
    %95 = vector.broadcast %cst_25 : f32 to vector<8x20xf32>
    %96 = arith.maximumf %94, %95 : vector<8x20xf32>
    %cst_26 = arith.constant dense<0.000000e+00> : vector<8x10xf32>
    %97 = tpu.matmul %96, %20, %cst_26 {dimension_numbers = #tpu.dot_dimension_numbers<[1], [0], [0], [1], [0, 0, 1, 1], [], []>} : vector<8x20xf32>, vector<20x10xf32>, vector<8x10xf32> -> vector<8x10xf32>
    %98 = vector.broadcast %11 : vector<1x10xf32> to vector<8x10xf32>
    %99 = arith.addf %97, %98 : vector<8x10xf32>
    %cst_27 = arith.constant dense<0.000000e+00> : vector<10xf32>
    %100 = vector.multi_reduction <add>, %99, %cst_27 [0] : vector<8x10xf32> to vector<10xf32>
    %101 = vector.shape_cast %100 : vector<10xf32> to vector<1x10xf32>
    %cst_28 = arith.constant 1.250000e-01 : f32
    %102 = vector.broadcast %cst_28 : f32 to vector<1x10xf32>
    %103 = arith.mulf %101, %102 : vector<1x10xf32>
    %104 = arith.mulf %99, %99 : vector<8x10xf32>
    %cst_29 = arith.constant dense<0.000000e+00> : vector<10xf32>
    %105 = vector.multi_reduction <add>, %104, %cst_29 [0] : vector<8x10xf32> to vector<10xf32>
    %106 = vector.shape_cast %105 : vector<10xf32> to vector<1x10xf32>
    %cst_30 = arith.constant 1.250000e-01 : f32
    %107 = vector.broadcast %cst_30 : f32 to vector<1x10xf32>
    %108 = arith.mulf %106, %107 : vector<1x10xf32>
    %109 = arith.mulf %103, %103 : vector<1x10xf32>
    %110 = arith.subf %108, %109 : vector<1x10xf32>
    %cst_31 = arith.constant 9.99999974E-6 : f32
    %111 = vector.broadcast %cst_31 : f32 to vector<1x10xf32>
    %112 = arith.addf %110, %111 : vector<1x10xf32>
    %113 = math.rsqrt %112 : vector<1x10xf32>
    %114 = arith.mulf %12, %113 : vector<1x10xf32>
    %115 = arith.mulf %103, %114 : vector<1x10xf32>
    %116 = arith.subf %13, %115 : vector<1x10xf32>
    %117 = vector.broadcast %114 : vector<1x10xf32> to vector<8x10xf32>
    %118 = arith.mulf %99, %117 : vector<8x10xf32>
    %119 = vector.broadcast %116 : vector<1x10xf32> to vector<8x10xf32>
    %120 = arith.addf %118, %119 : vector<8x10xf32>
    %cst_32 = arith.constant 0.000000e+00 : f32
    %121 = vector.broadcast %cst_32 : f32 to vector<8x10xf32>
    %122 = arith.maximumf %120, %121 : vector<8x10xf32>
    %cst_33 = arith.constant dense<0.000000e+00> : vector<8x10xf32>
    %123 = tpu.matmul %122, %21, %cst_33 {dimension_numbers = #tpu.dot_dimension_numbers<[1], [0], [0], [1], [0, 0, 1, 1], [], []>} : vector<8x10xf32>, vector<10x10xf32>, vector<8x10xf32> -> vector<8x10xf32>
    %124 = vector.broadcast %14 : vector<1x10xf32> to vector<8x10xf32>
    %125 = arith.addf %123, %124 : vector<8x10xf32>
    %cst_34 = arith.constant dense<0.000000e+00> : vector<10xf32>
    %126 = vector.multi_reduction <add>, %125, %cst_34 [0] : vector<8x10xf32> to vector<10xf32>
    %127 = vector.shape_cast %126 : vector<10xf32> to vector<1x10xf32>
    %cst_35 = arith.constant 1.250000e-01 : f32
    %128 = vector.broadcast %cst_35 : f32 to vector<1x10xf32>
    %129 = arith.mulf %127, %128 : vector<1x10xf32>
    %130 = arith.mulf %125, %125 : vector<8x10xf32>
    %cst_36 = arith.constant dense<0.000000e+00> : vector<10xf32>
    %131 = vector.multi_reduction <add>, %130, %cst_36 [0] : vector<8x10xf32> to vector<10xf32>
    %132 = vector.shape_cast %131 : vector<10xf32> to vector<1x10xf32>
    %cst_37 = arith.constant 1.250000e-01 : f32
    %133 = vector.broadcast %cst_37 : f32 to vector<1x10xf32>
    %134 = arith.mulf %132, %133 : vector<1x10xf32>
    %135 = arith.mulf %129, %129 : vector<1x10xf32>
    %136 = arith.subf %134, %135 : vector<1x10xf32>
    %cst_38 = arith.constant 9.99999974E-6 : f32
    %137 = vector.broadcast %cst_38 : f32 to vector<1x10xf32>
    %138 = arith.addf %136, %137 : vector<1x10xf32>
    %139 = math.rsqrt %138 : vector<1x10xf32>
    %140 = arith.mulf %15, %139 : vector<1x10xf32>
    %141 = arith.mulf %129, %140 : vector<1x10xf32>
    %142 = arith.subf %16, %141 : vector<1x10xf32>
    %143 = vector.broadcast %140 : vector<1x10xf32> to vector<8x10xf32>
    %144 = arith.mulf %125, %143 : vector<8x10xf32>
    %145 = vector.broadcast %142 : vector<1x10xf32> to vector<8x10xf32>
    %146 = arith.addf %144, %145 : vector<8x10xf32>
    %cst_39 = arith.constant 0.000000e+00 : f32
    %147 = vector.broadcast %cst_39 : f32 to vector<8x10xf32>
    %148 = arith.maximumf %146, %147 : vector<8x10xf32>
    %cst_40 = arith.constant dense<0.000000e+00> : vector<8x10xf32>
    %149 = tpu.matmul %148, %22, %cst_40 {dimension_numbers = #tpu.dot_dimension_numbers<[1], [0], [0], [1], [0, 0, 1, 1], [], []>} : vector<8x10xf32>, vector<10x10xf32>, vector<8x10xf32> -> vector<8x10xf32>
    %150 = vector.broadcast %17 : vector<1x10xf32> to vector<8x10xf32>
    %151 = arith.addf %149, %150 : vector<8x10xf32>
    %c0_41 = arith.constant 0 : index
    %c0_42 = arith.constant 0 : index
    %152 = vector.load %arg4[%c0_41, %c0_42] : memref<8x10xf32, #tpu.memory_space<vmem>>, vector<8x10xf32>
    tpu.vector_store %arg4[%c0_41, %c0_42], %151 {strides = array<i32>} : memref<8x10xf32, #tpu.memory_space<vmem>>, vector<8x10xf32>,
    return
  }
}

</mosaic_0001>

<llo_original>
// kernel: top_model_forward.1
$region0: #{top_model_forward.1}
  #allocation0 [shape = 'u32[]', space=smem, size = 0x4, offset = 0x4, fixed_abs, tag = 'smem constant byte address 0x4 - core index']
  #allocation1 [shape = 'u32[72,128]{1,0:T(1,128)}', space=vmem, size = 0x9000, scoped, tag = 'internal scratch']
  %s0 = inlined_call_operand.vmem [shape: f32[8,10], index: 0, kind: input, shape index: {}]
  %s1 = inlined_call_operand.vmem [shape: f32[8,10], index: 1, kind: input, shape index: {}]
  %s2 = inlined_call_operand.vmem [shape: f32[16,20], index: 2, kind: input, shape index: {}]
  %s3 = inlined_call_operand.vmem [shape: f32[88,20], index: 3, kind: input, shape index: {}]
  %s4 = inlined_call_operand.hbm [shape: f32[8,10], index: 4, kind: output, shape index: {}]
  %s5 = sld [smem:[#allocation0]]
  $region26: #{top_model_forward.1} parent=0
    _
  %s7 = ssub.s32 1, %s5
  %s8 = scalar_select 0, %s7, %s5
  $region1: #{top_model_forward.1} parent=0
    #allocation2 [shape = 'u8[4096]{0}', space=vmem, size = 0x1000, scoped, tag = 'output window, operand 0, single buffered']
    #allocation3 [shape = 's32[1]{0}', space=sflag, size = 0x4, scoped, tag = 'scoped memory for top_model_forward.1']
    %9 = vsyncpa [#allocation3], 0
    // Predicated region
    $region2: #{top_model_forward.1} parent=1 // pred_check
      _
    $region3: #{top_model_forward.1} parent=1 // pred_check_branch
      %11 = sbr.rel (0) target = $region5
    $region4: #{top_model_forward.1} parent=1 // pred_region
      _
    $region5: #{top_model_forward.1} parent=1 // pred_fallthru
      _
    // Predicated region
    $region6: #{top_model_forward.1} parent=1 // pred_check
      _
    $region7: #{top_model_forward.1} parent=1 // pred_check_branch
      %13 = sbr.rel (0) target = $region9
    $region8: #{top_model_forward.1} parent=1 // pred_region
      _
    $region9: #{top_model_forward.1} parent=1 // pred_fallthru
      _
    // Predicated region
    $region10: #{top_model_forward.1} parent=1 // pred_check
      _
    $region11: #{top_model_forward.1} parent=1 // pred_check_branch
      %15 = sbr.rel (0) target = $region13
    $region12: #{top_model_forward.1} parent=1 // pred_region
      _
    $region13: #{top_model_forward.1} parent=1 // pred_fallthru
      _
    // Predicated region
    $region14: #{top_model_forward.1} parent=1 // pred_check
      _
    $region15: #{top_model_forward.1} parent=1 // pred_check_branch
      %17 = sbr.rel (0) target = $region17
    $region16: #{top_model_forward.1} parent=1 // pred_region
      _
    $region17: #{top_model_forward.1} parent=1 // pred_fallthru
      _
    %v18 = vld [vmem:[%s0] sm:$0xff]
    %v19 = vld [vmem:[%s1] sm:$0xff]
    %v20 = vld [vmem:[%s2] sm:$0xff]
    %v21 = vld [vmem:[%s2 + $0x8] sm:$0xff]
    %v22 = vld [vmem:[%s3] sm:$0xff]
    %v23 = vld [vmem:[%s3 + $0x8] sm:$0xff]
    %v24 = vld [vmem:[%s3 + $0x10] sm:$0xff]
    %v25 = vld [vmem:[%s3 + $0x18] sm:$0xff]
    %v26 = vld [vmem:[%s3 + $0x20] sm:$0xff]
    %v27 = vld [vmem:[%s3 + $0x28] sm:$0xff]
    %v28 = vld [vmem:[%s3 + $0x30] sm:$0xff]
    %v29 = vld [vmem:[%s3 + $0x38] sm:$0xff]
    %v30 = vld [vmem:[%s3 + $0x40] sm:$0xff]
    %v31 = vld [vmem:[%s3 + $0x48] sm:$0xff]
    %v32 = vld [vmem:[%s3 + $0x50] sm:$0xff]
    %vm33 = vcmask 80896
    %v34 = vsel %vm33, %v18, 0.0
    %v35 = vrot.slane %v34, 4
    %v36 = vadd.f32 %v34, %v35
    %v37 = vrot.slane %v36, 2
    %v38 = vadd.f32 %v36, %v37
    %v39 = vrot.slane %v38, 1
    %v40 = vadd.f32 %v38, %v39
    %v41 = vmul.f32 %v40, 0.125
    %v42 = vmul.f32 %v18, %v18
    %v43 = vsel %vm33, %v42, 0.0
    %v44 = vrot.slane %v43, 4
    %v45 = vadd.f32 %v43, %v44
    %v46 = vrot.slane %v45, 2
    %v47 = vadd.f32 %v45, %v46
    %v48 = vrot.slane %v47, 1
    %v49 = vadd.f32 %v47, %v48
    %v50 = vmul.f32 %v49, 0.125
    %v51 = vmul.f32 %v41, %v41
    %v52 = vsub.f32 %v50, %v51
    %v53 = vadd.f32 %v52, 1e-05
    %v54 = vrsqrt.pop %v53
    %v55 = vmul.f32 %v54, %v53
    %v56 = vmul.f32 %v55, %v54
    %v57 = vmul.f32 0.5, %v56
    %v58 = vsub.f32 1.5, %v57
    %v59 = vmul.f32 %v54, %v58
    %vm60 = vweird.f32 %v53
    %vm61 = vweird.f32 %v54
    %vm62 = vmor %vm60, %vm61
    %v63 = vsel %vm62, %v54, %v59
    %v64 = vmul.f32 %v20, %v63
    %v65 = vmul.f32 %v41, %v64
    %v67 = vrot.slane %v65, 6
    %v69 = vsub.f32 %v20, %v67
    %v70 = vperm.slane %v64, 0
    %v71 = vmul.f32 %v18, %v70
    %v72 = vperm.slane %v69, 2
    %v73 = vadd.f32 %v71, %v72
    %v74 = vmax.f32 %v73, 0.0
    %v75 = vsel %vm33, %v19, 0.0
    %v76 = vrot.slane %v75, 4
    %v77 = vadd.f32 %v75, %v76
    %v78 = vrot.slane %v77, 2
    %v79 = vadd.f32 %v77, %v78
    %v80 = vrot.slane %v79, 1
    %v81 = vadd.f32 %v79, %v80
    %v82 = vmul.f32 %v81, 0.125
    %v83 = vmul.f32 %v19, %v19
    %v84 = vsel %vm33, %v83, 0.0
    %v85 = vrot.slane %v84, 4
    %v86 = vadd.f32 %v84, %v85
    %v87 = vrot.slane %v86, 2
    %v88 = vadd.f32 %v86, %v87
    %v89 = vrot.slane %v88, 1
    %v90 = vadd.f32 %v88, %v89
    %v91 = vmul.f32 %v90, 0.125
    %v92 = vmul.f32 %v82, %v82
    %v93 = vsub.f32 %v91, %v92
    %v94 = vadd.f32 %v93, 1e-05
    %v95 = vrsqrt.pop %v94
    %v96 = vmul.f32 %v95, %v94
    %v97 = vmul.f32 %v96, %v95
    %v98 = vmul.f32 0.5, %v97
    %v99 = vsub.f32 1.5, %v98
    %v100 = vmul.f32 %v95, %v99
    %vm101 = vweird.f32 %v94
    %vm102 = vweird.f32 %v95
    %vm103 = vmor %vm101, %vm102
    %v104 = vsel %vm103, %v95, %v100
    %v105 = vmul.f32 %v20, %v104
    %v106 = vmul.f32 %v82, %v105
    %v108 = vrot.slane %v106, 6
    %v110 = vsub.f32 %v20, %v108
    %v111 = vperm.slane %v105, 1
    %v112 = vmul.f32 %v19, %v111
    %v113 = vperm.slane %v110, 3
    %v114 = vadd.f32 %v112, %v113
    %v115 = vmax.f32 %v114, 0.0
    %v117 = vsel %vm33, %v115, 0
    %vm119 = vcmask 1041408
    %v121 = vsel %vm119, %v25, 0
    %123 = vmatpush.msra.mxu0 0.0
    %124 = vmatpush.msra.mxu0 0.0
    %125 = vmatpush.msra.mxu0 0.0
    %126 = vmatpush.msra.mxu0 0.0
    %127 = vmatpush.msra.mxu0 0.0
    %128 = vmatpush.msra.mxu0 0.0
    %129 = vmatpush.msra.mxu0 0.0
    %130 = vmatpush.msra.mxu0 0.0
    %131 = vmatpush.msra.mxu0 0.0
    %132 = vmatpush.msra.mxu0 0.0
    %133 = vmatpush.msra.mxu0 0.0
    %134 = vmatpush.msra.mxu0 0.0
    %135 = vmatpush.msra.mxu0 0.0
    %136 = vmatpush.msra.mxu0 0.0
    %137 = vmatpush.msra.mxu0 %v121
    %138 = vmatpush.msra.mxu0 %v24
    %139 = vmatmul.f32.gmra.mxu0 %v117
    %v140 = vpop.f32.mrf.mxu0
    %v141 = vadd.f32 0.0, %v140
    %142 = vdwg.mxu0
    %v144 = vsel %vm33, %v74, 0
    %v147 = vsel %vm119, %v23, 0
    %149 = vmatpush.msra.mxu0 0.0
    %150 = vmatpush.msra.mxu0 0.0
    %151 = vmatpush.msra.mxu0 0.0
    %152 = vmatpush.msra.mxu0 0.0
    %153 = vmatpush.msra.mxu0 0.0
    %154 = vmatpush.msra.mxu0 0.0
    %155 = vmatpush.msra.mxu0 0.0
    %156 = vmatpush.msra.mxu0 0.0
    %157 = vmatpush.msra.mxu0 0.0
    %158 = vmatpush.msra.mxu0 0.0
    %159 = vmatpush.msra.mxu0 0.0
    %160 = vmatpush.msra.mxu0 0.0
    %161 = vmatpush.msra.mxu0 0.0
    %162 = vmatpush.msra.mxu0 0.0
    %163 = vmatpush.msra.mxu0 %v147
    %164 = vmatpush.msra.mxu0 %v22
    %165 = vmatmul.f32.gmra.mxu0 %v144
    %v166 = vpop.f32.mrf.mxu0
    %v167 = vadd.f32 %v141, %v166
    %168 = vdwg.mxu0
    %v169 = vperm.slane %v20, 4
    %v170 = vadd.f32 %v167, %v169
    %vm171 = vcmask 162816
    %v172 = vsel %vm171, %v170, 0.0
    %v173 = vrot.slane %v172, 4
    %v174 = vadd.f32 %v172, %v173
    %v175 = vrot.slane %v174, 2
    %v176 = vadd.f32 %v174, %v175
    %v177 = vrot.slane %v176, 1
    %v178 = vadd.f32 %v176, %v177
    %v179 = vmul.f32 %v178, 0.125
    %v180 = vmul.f32 %v170, %v170
    %v181 = vsel %vm171, %v180, 0.0
    %v182 = vrot.slane %v181, 4
    %v183 = vadd.f32 %v181, %v182
    %v184 = vrot.slane %v183, 2
    %v185 = vadd.f32 %v183, %v184
    %v186 = vrot.slane %v185, 1
    %v187 = vadd.f32 %v185, %v186
    %v188 = vmul.f32 %v187, 0.125
    %v189 = vmul.f32 %v179, %v179
    %v190 = vsub.f32 %v188, %v189
    %v191 = vadd.f32 %v190, 1e-05
    %v192 = vrsqrt.pop %v191
    %v193 = vmul.f32 %v192, %v191
    %v194 = vmul.f32 %v193, %v192
    %v195 = vmul.f32 0.5, %v194
    %v196 = vsub.f32 1.5, %v195
    %v197 = vmul.f32 %v192, %v196
    %vm198 = vweird.f32 %v191
    %vm199 = vweird.f32 %v192
    %vm200 = vmor %vm198, %vm199
    %v201 = vsel %vm200, %v192, %v197
    %v202 = vmul.f32 %v20, %v201
    %v203 = vmul.f32 %v179, %v202
    %v205 = vrot.slane %v203, 7
    %v207 = vsub.f32 %v20, %v205
    %v208 = vperm.slane %v202, 5
    %v209 = vmul.f32 %v170, %v208
    %v210 = vperm.slane %v207, 6
    %v211 = vadd.f32 %v209, %v210
    %v212 = vmax.f32 %v211, 0.0
    %v213 = vperm.slane %v20, 7
    %v215 = vsel %vm171, %v212, 0
    %vm217 = vcmask 1043456
    %v219 = vsel %vm217, %v28, 0
    %221 = vmatpush.msra.mxu0 0.0
    %222 = vmatpush.msra.mxu0 0.0
    %223 = vmatpush.msra.mxu0 0.0
    %224 = vmatpush.msra.mxu0 0.0
    %225 = vmatpush.msra.mxu0 0.0
    %226 = vmatpush.msra.mxu0 0.0
    %227 = vmatpush.msra.mxu0 0.0
    %228 = vmatpush.msra.mxu0 0.0
    %229 = vmatpush.msra.mxu0 0.0
    %230 = vmatpush.msra.mxu0 0.0
    %231 = vmatpush.msra.mxu0 0.0
    %232 = vmatpush.msra.mxu0 0.0
    %233 = vmatpush.msra.mxu0 0.0
    %234 = vmatpush.msra.mxu0 %v219
    %235 = vmatpush.msra.mxu0 %v27
    %236 = vmatpush.msra.mxu0 %v26
    %237 = vmatmul.f32.gmra.mxu0 %v215
    %v238 = vpop.f32.mrf.mxu0
    %v239 = vadd.f32 %v213, %v238
    %240 = vdwg.mxu0
    %v241 = vsel %vm33, %v239, 0.0
    %v242 = vrot.slane %v241, 4
    %v243 = vadd.f32 %v241, %v242
    %v244 = vrot.slane %v243, 2
    %v245 = vadd.f32 %v243, %v244
    %v246 = vrot.slane %v245, 1
    %v247 = vadd.f32 %v245, %v246
    %v248 = vmul.f32 %v247, 0.125
    %v249 = vmul.f32 %v239, %v239
    %v250 = vsel %vm33, %v249, 0.0
    %v251 = vrot.slane %v250, 4
    %v252 = vadd.f32 %v250, %v251
    %v253 = vrot.slane %v252, 2
    %v254 = vadd.f32 %v252, %v253
    %v255 = vrot.slane %v254, 1
    %v256 = vadd.f32 %v254, %v255
    %v257 = vmul.f32 %v256, 0.125
    %v258 = vmul.f32 %v248, %v248
    %v259 = vsub.f32 %v257, %v258
    %v260 = vadd.f32 %v259, 1e-05
    %v261 = vrsqrt.pop %v260
    %v262 = vmul.f32 %v261, %v260
    %v263 = vmul.f32 %v262, %v261
    %v264 = vmul.f32 0.5, %v263
    %v265 = vsub.f32 1.5, %v264
    %v266 = vmul.f32 %v261, %v265
    %vm267 = vweird.f32 %v260
    %vm268 = vweird.f32 %v261
    %vm269 = vmor %vm267, %vm268
    %v270 = vsel %vm269, %v261, %v266
    %v271 = vmul.f32 %v21, %v270
    %v272 = vmul.f32 %v248, %v271
    %v274 = vrot.slane %v272, 7
    %v276 = vsub.f32 %v21, %v274
    %v277 = vperm.slane %v271, 0
    %v278 = vmul.f32 %v239, %v277
    %v279 = vperm.slane %v276, 1
    %v280 = vadd.f32 %v278, %v279
    %v281 = vmax.f32 %v280, 0.0
    %v282 = vperm.slane %v21, 2
    %v284 = vsel %vm33, %v281, 0
    %v287 = vsel %vm119, %v30, 0
    %289 = vmatpush.msra.mxu0 0.0
    %290 = vmatpush.msra.mxu0 0.0
    %291 = vmatpush.msra.mxu0 0.0
    %292 = vmatpush.msra.mxu0 0.0
    %293 = vmatpush.msra.mxu0 0.0
    %294 = vmatpush.msra.mxu0 0.0
    %295 = vmatpush.msra.mxu0 0.0
    %296 = vmatpush.msra.mxu0 0.0
    %297 = vmatpush.msra.mxu0 0.0
    %298 = vmatpush.msra.mxu0 0.0
    %299 = vmatpush.msra.mxu0 0.0
    %300 = vmatpush.msra.mxu0 0.0
    %301 = vmatpush.msra.mxu0 0.0
    %302 = vmatpush.msra.mxu0 0.0
    %303 = vmatpush.msra.mxu0 %v287
    %304 = vmatpush.msra.mxu0 %v29
    %305 = vmatmul.f32.gmra.mxu0 %v284
    %v306 = vpop.f32.mrf.mxu0
    %v307 = vadd.f32 %v282, %v306
    %308 = vdwg.mxu0
    %v309 = vsel %vm33, %v307, 0.0
    %v310 = vrot.slane %v309, 4
    %v311 = vadd.f32 %v309, %v310
    %v312 = vrot.slane %v311, 2
    %v313 = vadd.f32 %v311, %v312
    %v314 = vrot.slane %v313, 1
    %v315 = vadd.f32 %v313, %v314
    %v316 = vmul.f32 %v315, 0.125
    %v317 = vmul.f32 %v307, %v307
    %v318 = vsel %vm33, %v317, 0.0
    %v319 = vrot.slane %v318, 4
    %v320 = vadd.f32 %v318, %v319
    %v321 = vrot.slane %v320, 2
    %v322 = vadd.f32 %v320, %v321
    %v323 = vrot.slane %v322, 1
    %v324 = vadd.f32 %v322, %v323
    %v325 = vmul.f32 %v324, 0.125
    %v326 = vmul.f32 %v316, %v316
    %v327 = vsub.f32 %v325, %v326
    %v328 = vadd.f32 %v327, 1e-05
    %v329 = vrsqrt.pop %v328
    %v330 = vmul.f32 %v329, %v328
    %v331 = vmul.f32 %v330, %v329
    %v332 = vmul.f32 0.5, %v331
    %v333 = vsub.f32 1.5, %v332
    %v334 = vmul.f32 %v329, %v333
    %vm335 = vweird.f32 %v328
    %vm336 = vweird.f32 %v329
    %vm337 = vmor %vm335, %vm336
    %v338 = vsel %vm337, %v329, %v334
    %v339 = vmul.f32 %v21, %v338
    %v340 = vmul.f32 %v316, %v339
    %v342 = vrot.slane %v340, 7
    %v344 = vsub.f32 %v21, %v342
    %v345 = vperm.slane %v339, 3
    %v346 = vmul.f32 %v307, %v345
    %v347 = vperm.slane %v344, 4
    %v348 = vadd.f32 %v346, %v347
    %v349 = vmax.f32 %v348, 0.0
    %v350 = vperm.slane %v21, 5
    %v352 = vsel %vm33, %v349, 0
    %v355 = vsel %vm119, %v32, 0
    %357 = vmatpush.msra.mxu0 0.0
    %358 = vmatpush.msra.mxu0 0.0
    %359 = vmatpush.msra.mxu0 0.0
    %360 = vmatpush.msra.mxu0 0.0
    %361 = vmatpush.msra.mxu0 0.0
    %362 = vmatpush.msra.mxu0 0.0
    %363 = vmatpush.msra.mxu0 0.0
    %364 = vmatpush.msra.mxu0 0.0
    %365 = vmatpush.msra.mxu0 0.0
    %366 = vmatpush.msra.mxu0 0.0
    %367 = vmatpush.msra.mxu0 0.0
    %368 = vmatpush.msra.mxu0 0.0
    %369 = vmatpush.msra.mxu0 0.0
    %370 = vmatpush.msra.mxu0 0.0
    %371 = vmatpush.msra.mxu0 %v355
    %372 = vmatpush.msra.mxu0 %v31
    %373 = vmatmul.f32.gmra.mxu0 %v352
    %v374 = vpop.f32.mrf.mxu0
    %v375 = vadd.f32 %v350, %v374
    %376 = vdwg.mxu0
    %377 = vst.msk [vmem:[#allocation2] sm:$0xff] %vm33, %v375
    // Predicated region
    $region18: #{top_model_forward.1} parent=1 // pred_check
      _
    $region19: #{top_model_forward.1} parent=1 // pred_check_branch
      %379 = sbr.rel (0) target = $region21
    $region20: #{top_model_forward.1} parent=1 // pred_region
      %381 = vsyncadd [#allocation3], 0
      %s383 = sshll.u32 [#allocation2], 4
      %s384 = int_to_ptr.vmem [resolvable:$true] %s383
      %s385 = sshll.u32 %s4, 4
      %s386 = int_to_ptr.hbm [resolvable:$true] %s385
      %388 = dma.vmem_to_hbm [thread:$0]  %s384, 128, %s386, [#allocation3]
    $region21: #{top_model_forward.1} parent=1 // pred_fallthru
      _
    // Predicated region
    $region22: #{top_model_forward.1} parent=1 // pred_check
      _
    $region23: #{top_model_forward.1} parent=1 // pred_check_branch
      %390 = sbr.rel (0) target = $region25
    $region24: #{top_model_forward.1} parent=1 // pred_region
      %392 = dma.done [#allocation3], 128
    $region25: #{top_model_forward.1} parent=1 // pred_fallthru
      _
    %393 = vsyncpa [#allocation3], 1

</llo_original>
